<compile_context>
chip_gen: v5e
topology: v5e:2x2
jax: 0.10.0
libtpu: 0.0.40
codegen_flags: <defaults>
</compile_context>

<pallas_src>
import functools

import jax
import jax.numpy as jnp
from jax import lax
from jax.experimental import pallas as pl
from jax.experimental.pallas import tpu as pltpu


_VMEM_LIMIT = 64 * 1024 * 1024           # safe on v5e/v6e (128 MiB) and v7x (64 MiB)
_RESIDENT_BYTES_MAX = 12 * 1024 * 1024   # budget for the fused-time-loop path


# ------------------------------------------------------------------ utilities

def _round_up(x, m):
    return ((x + m - 1) // m) * m


def _batch_tiling(n):
    """Pick (n_pad, bn): lane/sublane friendly; >=2 tiles for large batches."""
    n8 = _round_up(n, 8)
    if n8 <= 256:
        return n8, n8                      # single tile
    n_pad = _round_up(n, 256)
    return n_pad, 256                      # >=2 tiles -> both TCs on v7x


def _wrap_time_index(t, dt, time_steps):
    """PyTorch semantics: x_traj[time_steps - int(t/dt) - 1] (negative wraps)."""
    idx = time_steps - int(t / dt) - 1
    if idx < -time_steps or idx >= time_steps:
        raise IndexError(
            f"time index {idx} out of range for time_steps={time_steps}")
    return idx % time_steps


# -------------------------------------------------------------------- kernels

def _adj_field_kernel(w_ref, b_ref, x_ref, p_ref, out_ref):
    """out = -((1 - tanh(x @ W^T + b)^2) * p) @ W for one (pre-sliced) time idx."""
    w = w_ref[...]                                # [d, d]
    b = b_ref[...]                                # [1, d]
    x = x_ref[...]                                # [bn, d]
    p = p_ref[...].astype(jnp.float32)            # [bn, d]

    # x @ W^T without materializing W^T: contract W's last dim (MXU trans_b form).
    pre = lax.dot_general(x, w, (((1,), (1,)), ((), ())),
                          preferred_element_type=jnp.float32) + b
    th = jnp.tanh(pre)                            # one EUP transcendental / elem
    s = 1.0 - th * th
    out = -jnp.dot((s * p).astype(x.dtype), w, preferred_element_type=jnp.float32)
    out_ref[...] = out.astype(out_ref.dtype)


def _adj_solve_resident_kernel(w_ref, b_ref, x_ref, p0_ref, out_ref, *,
                               dt, time_steps, unroll):
    """All time steps fused in-kernel; W / b / x_traj are VMEM-resident blocks."""
    def body(step, p):
        i = time_steps - 1 - step                 # adjoint runs backwards in time
        w = w_ref[i]                              # [d, d]
        x = x_ref[i]                              # [bn, d]
        b = b_ref[i]                              # [1, d]
        pre = lax.dot_general(x, w, (((1,), (1,)), ((), ())),
                              preferred_element_type=jnp.float32) + b
        th = jnp.tanh(pre)
        s = 1.0 - th * th
        f = -jnp.dot((s * p).astype(x.dtype), w,
                     preferred_element_type=jnp.float32)
        return p + dt * f

    p = lax.fori_loop(0, time_steps, body, p0_ref[...].astype(jnp.float32),
                      unroll=unroll)
    out_ref[...] = p.astype(out_ref.dtype)


def _adj_solve_stream_kernel(w_ref, b_ref, x_ref, p0_ref, out_ref, p_acc, *,
                             dt, time_steps):
    """One explicit-Euler step per grid iteration; W/x streamed, p in scratch."""
    step = pl.program_id(1)

    @pl.when(step == 0)
    def _():
        p_acc[...] = p0_ref[...].astype(jnp.float32)

    w = w_ref[0]                                  # [d, d]   this step's W slice
    x = x_ref[0]                                  # [bn, d]
    b = b_ref[time_steps - 1 - step]              # [1, d]   resident bias stack

    pre = lax.dot_general(x, w, (((1,), (1,)), ((), ())),
                          preferred_element_type=jnp.float32) + b
    th = jnp.tanh(pre)
    s = 1.0 - th * th
    f = -jnp.dot((s * p_acc[...]).astype(x.dtype), w,
                 preferred_element_type=jnp.float32)
    p_acc[...] = p_acc[...] + dt * f

    @pl.when(step == pl.num_programs(1) - 1)
    def _():
        out_ref[...] = p_acc[...].astype(out_ref.dtype)


# ------------------------------------------------------------------- wrappers

def adj_dynamics_forward(t, p, weights, biases, x_traj, T, time_steps):
    """One evaluation of the adjoint vector field (== adj_Dynamics.forward)."""
    n, d = p.shape
    dt = T / time_steps
    idx = _wrap_time_index(t, dt, time_steps)

    d_pad = _round_up(d, 128)
    n_pad, bn = _batch_tiling(n)
    nb = n_pad // bn

    # Slice the single time index FIRST, then pad (O(d^2) host-side prep).
    w_p = jnp.pad(weights[idx], ((0, d_pad - d), (0, d_pad - d)))
    b_p = jnp.pad(biases[idx], ((0, d_pad - d),))[None, :]
    x_p = jnp.pad(x_traj[idx], ((0, n_pad - n), (0, d_pad - d)))
    p_p = jnp.pad(p, ((0, n_pad - n), (0, d_pad - d)))

    cost = pl.CostEstimate(
        flops=4 * n_pad * d_pad * d_pad,
        transcendentals=n_pad * d_pad,
        bytes_accessed=4 * (nb * d_pad * d_pad + nb * d_pad + 3 * n_pad * d_pad),
    )

    out = pl.pallas_call(
        _adj_field_kernel,
        out_shape=jax.ShapeDtypeStruct((n_pad, d_pad), p.dtype),
        grid_spec=pltpu.PrefetchScalarGridSpec(
            num_scalar_prefetch=0,
            grid=(nb,),
            in_specs=[
                pl.BlockSpec((d_pad, d_pad), lambda bi: (0, 0)),        # W
                pl.BlockSpec((1, d_pad), lambda bi: (0, 0)),            # b
                pl.BlockSpec((bn, d_pad), lambda bi: (bi, 0)),          # x
                pl.BlockSpec((bn, d_pad), lambda bi: (bi, 0)),          # p
            ],
            out_specs=pl.BlockSpec((bn, d_pad), lambda bi: (bi, 0)),
        ),
        compiler_params=pltpu.CompilerParams(
            dimension_semantics=("parallel",),
            vmem_limit_bytes=_VMEM_LIMIT,
        ),
        cost_estimate=cost,
    )(w_p, b_p, x_p, p_p)
    return out[:n, :d]


def adj_dynamics_solve(p0, weights, biases, x_traj, T, time_steps, mode="auto"):
    """Fused adjoint integration (explicit Euler, t = 0 .. T) in one pallas_call.

    p_{s+1} = p_s + dt * adj_field(s * dt, p_s); the vector field at step s
    uses forward time index time_steps - 1 - s.
    """
    n, d = p0.shape
    ts = time_steps
    dt = T / time_steps

    d_pad = _round_up(d, 128)
    n_pad, bn = _batch_tiling(n)
    nb = n_pad // bn

    w_p = jnp.pad(weights, ((0, 0), (0, d_pad - d), (0, d_pad - d)))
    b3 = jnp.pad(biases, ((0, 0), (0, d_pad - d)))[:, None, :]        # [ts,1,d]
    x_p = jnp.pad(x_traj, ((0, 0), (0, n_pad - n), (0, d_pad - d)))
    p_p = jnp.pad(p0, ((0, n_pad - n), (0, d_pad - d)))

    cost = pl.CostEstimate(
        flops=4 * n_pad * d_pad * d_pad * ts,
        transcendentals=n_pad * d_pad * ts,
        bytes_accessed=4 * (nb * ts * d_pad * d_pad + nb * ts * d_pad
                            + ts * n_pad * d_pad + 2 * n_pad * d_pad),
    )

    resident_bytes = 4 * (ts * d_pad * d_pad + ts * d_pad
                          + ts * bn * d_pad + 2 * bn * d_pad)
    if mode == "auto":
        mode = "resident" if resident_bytes <= _RESIDENT_BYTES_MAX else "stream"

    if mode == "resident":
        # Whole W / b / x_traj stacks VMEM-resident; time loop inside the kernel.
        kernel = functools.partial(_adj_solve_resident_kernel, dt=dt,
                                   time_steps=ts, unroll=ts <= 16)
        grid_spec = pltpu.PrefetchScalarGridSpec(
            num_scalar_prefetch=0,
            grid=(nb,),
            in_specs=[
                pl.BlockSpec((ts, d_pad, d_pad), lambda bi: (0, 0, 0)),  # W stack
                pl.BlockSpec((ts, 1, d_pad), lambda bi: (0, 0, 0)),      # b stack
                pl.BlockSpec((ts, bn, d_pad), lambda bi: (0, bi, 0)),    # x_traj
                pl.BlockSpec((bn, d_pad), lambda bi: (bi, 0)),           # p0
            ],
            out_specs=pl.BlockSpec((bn, d_pad), lambda bi: (bi, 0)),
        )
        dims = ("parallel",)
    else:
        # Streaming fallback for large ts * d_pad^2: one W / x slice per step.
        # TODO(synk): if the weight DMA is still exposed here, raise
        # pipeline_mode=pl.Buffered(3) on the W / x_traj specs (check VMEM on v7x).
        kernel = functools.partial(_adj_solve_stream_kernel, dt=dt, time_steps=ts)
        grid_spec = pltpu.PrefetchScalarGridSpec(
            num_scalar_prefetch=0,
            grid=(nb, ts),
            in_specs=[
                pl.BlockSpec((1, d_pad, d_pad),
                             lambda bi, s: (ts - 1 - s, 0, 0)),          # W slice
                pl.BlockSpec((ts, 1, d_pad), lambda bi, s: (0, 0, 0)),   # b (resident)
                pl.BlockSpec((1, bn, d_pad),
                             lambda bi, s: (ts - 1 - s, bi, 0)),         # x slice
                pl.BlockSpec((bn, d_pad), lambda bi, s: (bi, 0)),        # p0
            ],
            out_specs=pl.BlockSpec((bn, d_pad), lambda bi, s: (bi, 0)),
            scratch_shapes=[pltpu.VMEM((bn, d_pad), jnp.float32)],       # p acc
        )
        dims = ("parallel", "arbitrary")

    out = pl.pallas_call(
        kernel,
        out_shape=jax.ShapeDtypeStruct((n_pad, d_pad), p0.dtype),
        grid_spec=grid_spec,
        compiler_params=pltpu.CompilerParams(
            dimension_semantics=dims,
            vmem_limit_bytes=_VMEM_LIMIT,
        ),
        cost_estimate=cost,
    )(w_p, b3, x_p, p_p)
    return out[:n, :d]


# ----------------------------------------------------------------- references

def adj_field_reference(t, p, weights, biases, x_traj, T, time_steps):
    """Plain-JAX mirror of the PyTorch forward (negative index wraps)."""
    dt = T / time_steps
    i = _wrap_time_index(t, dt, time_steps)
    w = weights[i]
    b = biases[i]
    x = x_traj[i]
    pre = jnp.dot(x, w.T, precision=jax.lax.Precision.HIGHEST) + b
    th = jnp.tanh(pre)
    s = 1.0 - th * th
    return -jnp.dot(s * p, w, precision=jax.lax.Precision.HIGHEST)


def adj_solve_reference(p0, weights, biases, x_traj, T, time_steps):
    dt = T / time_steps
    p = p0
    for s in range(time_steps):
        p = p + dt * adj_field_reference(s * dt, p, weights, biases, x_traj,
                                         T, time_steps)
    return p


# ------------------------------------------------------------------------ main

if __name__ == "__main__":
    data_dim = 16        # features
    batch = 8            # number of samples
    T = 10
    time_steps = 10
    t = 3.0              # adjoint time for the single-step check

    key = jax.random.PRNGKey(0)
    kw, kb, kx, kp = jax.random.split(key, 4)

    weights = 0.1 * jax.random.normal(kw, (time_steps, data_dim, data_dim),
                                      dtype=jnp.float32)
    biases = 0.1 * jax.random.normal(kb, (time_steps, data_dim), dtype=jnp.float32)
    x_traj = jax.random.normal(kx, (time_steps, batch, data_dim), dtype=jnp.float32)
    p = jax.random.normal(kp, (batch, data_dim), dtype=jnp.float32)

    # 1) single evaluation of the adjoint vector field (module forward semantics)
    out = jax.block_until_ready(
        adj_dynamics_forward(t, p, weights, biases, x_traj, T, time_steps))
    ref = adj_field_reference(t, p, weights, biases, x_traj, T, time_steps)
    assert out.shape == (batch, data_dim)
    assert jnp.allclose(out, ref, rtol=2e-3, atol=2e-3), \
        "single-step mismatch vs reference"

    # 2) fused adjoint integration, resident-weights path (default at this size)
    pT = jax.block_until_ready(
        adj_dynamics_solve(p, weights, biases, x_traj, T, time_steps,
                           mode="resident"))
    pT_ref = adj_solve_reference(p, weights, biases, x_traj, T, time_steps)
    assert pT.shape == (batch, data_dim)
    scale = float(jnp.max(jnp.abs(pT_ref))) + 1e-6
    assert jnp.allclose(pT, pT_ref, rtol=2e-3, atol=2e-3 * scale), \
        "resident solve mismatch vs reference"

    # 3) streaming fallback path (used when time_steps * d_pad^2 exceeds VMEM)
    pT_s = jax.block_until_ready(
        adj_dynamics_solve(p, weights, biases, x_traj, T, time_steps,
                           mode="stream"))
    assert jnp.allclose(pT_s, pT_ref, rtol=2e-3, atol=2e-3 * scale), \
        "streamed solve mismatch vs reference"

    print("KERNEL_OK")
</pallas_src>

<mosaic_0001>
module attributes {stable_mosaic.version = 11 : i64} {
  func.func @_adj_field_kernel(%arg0: i32, %arg1: memref<128x128xf32, #tpu.memory_space<vmem>>, %arg2: memref<1x128xf32, #tpu.memory_space<vmem>>, %arg3: memref<8x128xf32, #tpu.memory_space<vmem>>, %arg4: memref<8x128xf32, #tpu.memory_space<vmem>>, %arg5: memref<8x128xf32, #tpu.memory_space<vmem>>) attributes {dimension_semantics = [#tpu.dimension_semantics<parallel>], iteration_bounds = array<i64: 1>, scalar_prefetch = 0 : i64, scratch_operands = 0 : i64, tpu.core_type = #tpu.core_type<tc>, window_params = [{pipeline_mode = #tpu.pipeline_mode<synchronous>, transform_indices = @transform_0, window_bounds = array<i64: 128, 128>}, {pipeline_mode = #tpu.pipeline_mode<synchronous>, transform_indices = @transform_1, window_bounds = array<i64: 1, 128>}, {transform_indices = @transform_2, window_bounds = array<i64: 8, 128>}, {transform_indices = @transform_3, window_bounds = array<i64: 8, 128>}, {transform_indices = @transform_4, window_bounds = array<i64: 8, 128>}]} {
    %c0 = arith.constant 0 : index
    %c0_0 = arith.constant 0 : index
    %0 = vector.load %arg1[%c0, %c0_0] : memref<128x128xf32, #tpu.memory_space<vmem>>, vector<128x128xf32>
    %c0_1 = arith.constant 0 : index
    %c0_2 = arith.constant 0 : index
    %1 = vector.load %arg2[%c0_1, %c0_2] : memref<1x128xf32, #tpu.memory_space<vmem>>, vector<1x128xf32>
    %c0_3 = arith.constant 0 : index
    %c0_4 = arith.constant 0 : index
    %2 = vector.load %arg3[%c0_3, %c0_4] : memref<8x128xf32, #tpu.memory_space<vmem>>, vector<8x128xf32>
    %c0_5 = arith.constant 0 : index
    %c0_6 = arith.constant 0 : index
    %3 = vector.load %arg4[%c0_5, %c0_6] : memref<8x128xf32, #tpu.memory_space<vmem>>, vector<8x128xf32>
    %cst = arith.constant dense<0.000000e+00> : vector<8x128xf32>
    %4 = tpu.matmul %2, %0, %cst {dimension_numbers = #tpu.dot_dimension_numbers<[1], [1], [0], [0], [0, 0, 1, 0], [], []>} : vector<8x128xf32>, vector<128x128xf32>, vector<8x128xf32> -> vector<8x128xf32>
    %5 = vector.broadcast %1 : vector<1x128xf32> to vector<8x128xf32>
    %6 = arith.addf %4, %5 : vector<8x128xf32>
    %7 = math.tanh %6 : vector<8x128xf32>
    %8 = arith.mulf %7, %7 : vector<8x128xf32>
    %cst_7 = arith.constant 1.000000e+00 : f32
    %9 = vector.broadcast %cst_7 : f32 to vector<8x128xf32>
    %10 = arith.subf %9, %8 : vector<8x128xf32>
    %11 = arith.mulf %10, %3 : vector<8x128xf32>
    %cst_8 = arith.constant dense<0.000000e+00> : vector<8x128xf32>
    %12 = tpu.matmul %11, %0, %cst_8 {dimension_numbers = #tpu.dot_dimension_numbers<[1], [0], [0], [1], [0, 0, 1, 1], [], []>} : vector<8x128xf32>, vector<128x128xf32>, vector<8x128xf32> -> vector<8x128xf32>
    %cst_9 = arith.constant 0.000000e+00 : f32
    %13 = vector.broadcast %cst_9 : f32 to vector<8x128xf32>
    %14 = arith.subf %13, %12 : vector<8x128xf32>
    %c0_10 = arith.constant 0 : index
    %c0_11 = arith.constant 0 : index
    %15 = vector.load %arg5[%c0_10, %c0_11] : memref<8x128xf32, #tpu.memory_space<vmem>>, vector<8x128xf32>
    tpu.vector_store %arg5[%c0_10, %c0_11], %14 {strides = array<i32>} : memref<8x128xf32, #tpu.memory_space<vmem>>, vector<8x128xf32>,
    return
  }
  func.func @transform_0(%arg0: i32) -> (i32, i32) {
    %c0_i32 = arith.constant 0 : i32
    %c0_i32_0 = arith.constant 0 : i32
    %c0_i32_1 = arith.constant 0 : i32
    return %c0_i32, %c0_i32_0 : i32, i32
  }
  func.func @transform_1(%arg0: i32) -> (i32, i32) {
    %c0_i32 = arith.constant 0 : i32
    %c0_i32_0 = arith.constant 0 : i32
    %c0_i32_1 = arith.constant 0 : i32
    return %c0_i32, %c0_i32_0 : i32, i32
  }
  func.func @transform_2(%arg0: i32) -> (i32, i32) {
    %c0_i32 = arith.constant 0 : i32
    %c0_i32_0 = arith.constant 0 : i32
    return %arg0, %c0_i32 : i32, i32
  }
  func.func @transform_3(%arg0: i32) -> (i32, i32) {
    %c0_i32 = arith.constant 0 : i32
    %c0_i32_0 = arith.constant 0 : i32
    return %arg0, %c0_i32 : i32, i32
  }
  func.func @transform_4(%arg0: i32) -> (i32, i32) {
    %c0_i32 = arith.constant 0 : i32
    %c0_i32_0 = arith.constant 0 : i32
    return %arg0, %c0_i32 : i32, i32
  }
}

</mosaic_0001>

<llo_original>
// kernel: tpu_custom_call.1
$region0: #{tpu_custom_call.1}
  #allocation0 [shape = 'u32[]', space=smem, size = 0x4, offset = 0x4, fixed_abs, tag = 'smem constant byte address 0x4 - core index']
  #allocation1 [shape = 'u32[72,128]{1,0:T(1,128)}', space=vmem, size = 0x9000, scoped, tag = 'internal scratch']
  %s0 = inlined_call_operand.hbm [shape: f32[128,128], index: 0, kind: input, shape index: {}]
  %s1 = inlined_call_operand.hbm [shape: f32[1,128], index: 1, kind: input, shape index: {}]
  %s2 = inlined_call_operand.hbm [shape: f32[8,128], index: 2, kind: input, shape index: {}]
  %s3 = inlined_call_operand.hbm [shape: f32[8,128], index: 3, kind: input, shape index: {}]
  %s4 = inlined_call_operand.hbm [shape: f32[8,128], index: 4, kind: output, shape index: {}]
  %s5 = sld [smem:[#allocation0]]
  $region42: #{tpu_custom_call.1} parent=0
    _
  %s7 = ssub.s32 1, %s5
  %s8 = scalar_select 0, %s7, %s5
  $region1: #{tpu_custom_call.1} parent=0
    #allocation2 [shape = 'u8[65536]{0}', space=vmem, size = 0x10000, scoped, tag = 'input window, operand 0, single buffered']
    #allocation3 [shape = 's32[1]{0}', space=sflag, size = 0x4, scoped, tag = 'scoped memory for tpu_custom_call.1']
    #allocation4 [shape = 's32[1]{0}', space=sflag, size = 0x4, scoped, tag = 'scoped memory for tpu_custom_call.1']
    #allocation5 [shape = 'u8[512]{0}', space=vmem, size = 0x400, scoped, tag = 'input window, operand 1, single buffered']
    #allocation6 [shape = 's32[1]{0}', space=sflag, size = 0x4, scoped, tag = 'scoped memory for tpu_custom_call.1']
    #allocation7 [shape = 'u8[4096]{0}', space=vmem, size = 0x1000, scoped, tag = 'input window, operand 2, single buffered']
    #allocation8 [shape = 'u8[4096]{0}', space=vmem, size = 0x1000, scoped, tag = 'input window, operand 3, single buffered']
    #allocation9 [shape = 's32[1]{0}', space=sflag, size = 0x4, scoped, tag = 'scoped memory for tpu_custom_call.1']
    #allocation10 [shape = 'u8[4096]{0}', space=vmem, size = 0x1000, scoped, tag = 'output window, operand 0, single buffered']
    %9 = vsyncpa [#allocation3], 0
    %10 = vsyncpa [#allocation6], 0
    %11 = vsyncpa [#allocation9], 0
    %12 = vsyncpa [#allocation4], 0
    // Predicated region
    $region2: #{tpu_custom_call.1} parent=1 // pred_check
      _
    $region3: #{tpu_custom_call.1} parent=1 // pred_check_branch
      %14 = sbr.rel (0) target = $region5
    $region4: #{tpu_custom_call.1} parent=1 // pred_region
      %16 = vsyncadd [#allocation3], 0
      %s17 = sshll.u32 %s0, 4
      %s18 = int_to_ptr.hbm [resolvable:$true] %s17
      %s19 = sshll.u32 [#allocation2], 4
      %s20 = int_to_ptr.vmem [resolvable:$true] %s19
      %25 = dma.hbm_to_vmem [thread:$0]  %s18, 2048, %s20, [#allocation3], 128, 128, 8
    $region5: #{tpu_custom_call.1} parent=1 // pred_fallthru
      _
    // Predicated region
    $region6: #{tpu_custom_call.1} parent=1 // pred_check
      _
    $region7: #{tpu_custom_call.1} parent=1 // pred_check_branch
      %27 = sbr.rel (0) target = $region9
    $region8: #{tpu_custom_call.1} parent=1 // pred_region
      %29 = vsyncadd [#allocation6], 0
      %s31 = sshll.u32 %s1, 4
      %s32 = int_to_ptr.hbm [resolvable:$true] %s31
      %s33 = sshll.u32 [#allocation5], 4
      %s34 = int_to_ptr.vmem [resolvable:$true] %s33
      %36 = dma.hbm_to_vmem [thread:$0]  %s32, 16, %s34, [#allocation6]
    $region9: #{tpu_custom_call.1} parent=1 // pred_fallthru
      _
    // Predicated region
    $region10: #{tpu_custom_call.1} parent=1 // pred_check
      _
    $region11: #{tpu_custom_call.1} parent=1 // pred_check_branch
      %38 = sbr.rel (0) target = $region13
    $region12: #{tpu_custom_call.1} parent=1 // pred_region
      %40 = vsyncadd [#allocation6], 0
      %s42 = sshll.u32 %s2, 4
      %s43 = int_to_ptr.hbm [resolvable:$true] %s42
      %s44 = sshll.u32 [#allocation7], 4
      %s45 = int_to_ptr.vmem [resolvable:$true] %s44
      %47 = dma.hbm_to_vmem [thread:$0]  %s43, 128, %s45, [#allocation6]
    $region13: #{tpu_custom_call.1} parent=1 // pred_fallthru
      _
    // Predicated region
    $region14: #{tpu_custom_call.1} parent=1 // pred_check
      _
    $region15: #{tpu_custom_call.1} parent=1 // pred_check_branch
      %49 = sbr.rel (0) target = $region17
    $region16: #{tpu_custom_call.1} parent=1 // pred_region
      %51 = vsyncadd [#allocation9], 0
      %s53 = sshll.u32 %s3, 4
      %s54 = int_to_ptr.hbm [resolvable:$true] %s53
      %s55 = sshll.u32 [#allocation8], 4
      %s56 = int_to_ptr.vmem [resolvable:$true] %s55
      %58 = dma.hbm_to_vmem [thread:$0]  %s54, 128, %s56, [#allocation9]
    $region17: #{tpu_custom_call.1} parent=1 // pred_fallthru
      _
    // Predicated region
    $region18: #{tpu_custom_call.1} parent=1 // pred_check
      _
    $region19: #{tpu_custom_call.1} parent=1 // pred_check_branch
      %60 = sbr.rel (0) target = $region21
    $region20: #{tpu_custom_call.1} parent=1 // pred_region
      %62 = dma.done [#allocation3], 2048
    $region21: #{tpu_custom_call.1} parent=1 // pred_fallthru
      _
    // Predicated region
    $region22: #{tpu_custom_call.1} parent=1 // pred_check
      _
    $region23: #{tpu_custom_call.1} parent=1 // pred_check_branch
      %64 = sbr.rel (0) target = $region25
    $region24: #{tpu_custom_call.1} parent=1 // pred_region
      %66 = dma.done [#allocation6], 16
    $region25: #{tpu_custom_call.1} parent=1 // pred_fallthru
      _
    // Predicated region
    $region26: #{tpu_custom_call.1} parent=1 // pred_check
      _
    $region27: #{tpu_custom_call.1} parent=1 // pred_check_branch
      %68 = sbr.rel (0) target = $region29
    $region28: #{tpu_custom_call.1} parent=1 // pred_region
      %70 = dma.done [#allocation6], 128
    $region29: #{tpu_custom_call.1} parent=1 // pred_fallthru
      _
    // Predicated region
    $region30: #{tpu_custom_call.1} parent=1 // pred_check
      _
    $region31: #{tpu_custom_call.1} parent=1 // pred_check_branch
      %72 = sbr.rel (0) target = $region33
    $region32: #{tpu_custom_call.1} parent=1 // pred_region
      %74 = dma.done [#allocation9], 128
    $region33: #{tpu_custom_call.1} parent=1 // pred_fallthru
      _
    %v75 = vld [vmem:[#allocation2] sm:$0xff]
    %v76 = vld [vmem:[#allocation2 + $0x8] sm:$0xff]
    %v77 = vld [vmem:[#allocation2 + $0x10] sm:$0xff]
    %v78 = vld [vmem:[#allocation2 + $0x18] sm:$0xff]
    %v79 = vld [vmem:[#allocation2 + $0x20] sm:$0xff]
    %v80 = vld [vmem:[#allocation2 + $0x28] sm:$0xff]
    %v81 = vld [vmem:[#allocation2 + $0x30] sm:$0xff]
    %v82 = vld [vmem:[#allocation2 + $0x38] sm:$0xff]
    %v83 = vld [vmem:[#allocation2 + $0x40] sm:$0xff]
    %v84 = vld [vmem:[#allocation2 + $0x48] sm:$0xff]
    %v85 = vld [vmem:[#allocation2 + $0x50] sm:$0xff]
    %v86 = vld [vmem:[#allocation2 + $0x58] sm:$0xff]
    %v87 = vld [vmem:[#allocation2 + $0x60] sm:$0xff]
    %v88 = vld [vmem:[#allocation2 + $0x68] sm:$0xff]
    %v89 = vld [vmem:[#allocation2 + $0x70] sm:$0xff]
    %v90 = vld [vmem:[#allocation2 + $0x78] sm:$0xff]
    %v91 = vld [vmem:[#allocation5] sm:$0x1]
    %v92 = vld [vmem:[#allocation7] sm:$0xff]
    %v93 = vld [vmem:[#allocation8] sm:$0xff]
    %v95 = vperm.slane %v91, 0
    %97 = vmatpush.xpose.msra.mxu0 %v90
    %98 = vmatpush.xpose.msra.mxu0 %v89
    %99 = vmatpush.xpose.msra.mxu0 %v88
    %100 = vmatpush.xpose.msra.mxu0 %v87
    %101 = vmatpush.xpose.msra.mxu0 %v86
    %102 = vmatpush.xpose.msra.mxu0 %v85
    %103 = vmatpush.xpose.msra.mxu0 %v84
    %104 = vmatpush.xpose.msra.mxu0 %v83
    %105 = vmatpush.xpose.msra.mxu0 %v82
    %106 = vmatpush.xpose.msra.mxu0 %v81
    %107 = vmatpush.xpose.msra.mxu0 %v80
    %108 = vmatpush.xpose.msra.mxu0 %v79
    %109 = vmatpush.xpose.msra.mxu0 %v78
    %110 = vmatpush.xpose.msra.mxu0 %v77
    %111 = vmatpush.xpose.msra.mxu0 %v76
    %112 = vmatpush.xpose.msra.mxu0 %v75
    %113 = vmatmul.f32.gmra.mxu0 %v92
    %v114 = vpop.f32.mrf.mxu0
    %v115 = vadd.f32 %v95, %v114
    %116 = vdwg.mxu0
    %v117 = vtanh.pop %v115
    %v118 = vmul.f32 %v117, %v117
    %v119 = vsub.f32 1.0, %v118
    %v120 = vmul.f32 %v119, %v93
    %121 = vmatpush.msra.mxu0 %v90
    %122 = vmatpush.msra.mxu0 %v89
    %123 = vmatpush.msra.mxu0 %v88
    %124 = vmatpush.msra.mxu0 %v87
    %125 = vmatpush.msra.mxu0 %v86
    %126 = vmatpush.msra.mxu0 %v85
    %127 = vmatpush.msra.mxu0 %v84
    %128 = vmatpush.msra.mxu0 %v83
    %129 = vmatpush.msra.mxu0 %v82
    %130 = vmatpush.msra.mxu0 %v81
    %131 = vmatpush.msra.mxu0 %v80
    %132 = vmatpush.msra.mxu0 %v79
    %133 = vmatpush.msra.mxu0 %v78
    %134 = vmatpush.msra.mxu0 %v77
    %135 = vmatpush.msra.mxu0 %v76
    %136 = vmatpush.msra.mxu0 %v75
    %137 = vmatmul.f32.gmra.mxu0 %v120
    %v138 = vpop.f32.mrf.mxu0
    %v139 = vadd.f32 0.0, %v138
    %140 = vdwg.mxu0
    %v141 = vsub.f32 0.0, %v139
    %142 = vst [vmem:[#allocation10] sm:$0xff] %v141
    // Predicated region
    $region34: #{tpu_custom_call.1} parent=1 // pred_check
      _
    $region35: #{tpu_custom_call.1} parent=1 // pred_check_branch
      %144 = sbr.rel (0) target = $region37
    $region36: #{tpu_custom_call.1} parent=1 // pred_region
      %146 = vsyncadd [#allocation4], 0
      %s148 = sshll.u32 [#allocation10], 4
      %s149 = int_to_ptr.vmem [resolvable:$true] %s148
      %s150 = sshll.u32 %s4, 4
      %s151 = int_to_ptr.hbm [resolvable:$true] %s150
      %153 = dma.vmem_to_hbm [thread:$0]  %s149, 128, %s151, [#allocation4]
    $region37: #{tpu_custom_call.1} parent=1 // pred_fallthru
      _
    // Predicated region
    $region38: #{tpu_custom_call.1} parent=1 // pred_check
      _
    $region39: #{tpu_custom_call.1} parent=1 // pred_check_branch
      %155 = sbr.rel (0) target = $region41
    $region40: #{tpu_custom_call.1} parent=1 // pred_region
      %157 = dma.done [#allocation4], 128
    $region41: #{tpu_custom_call.1} parent=1 // pred_fallthru
      _
    %158 = vsyncpa [#allocation3], 1
    %159 = vsyncpa [#allocation6], 1
    %160 = vsyncpa [#allocation9], 1
    %161 = vsyncpa [#allocation4], 1

</llo_original>
